<compile_context>
chip_gen: v5e
topology: v5e:2x2
jax: 0.10.0
libtpu: 0.0.40
codegen_flags: <defaults>
</compile_context>

<pallas_src>
import functools
import math

import jax
import jax.numpy as jnp
from jax.experimental import pallas as pl
from jax.experimental.pallas import tpu as pltpu


def _round_up(x, m):
    return ((x + m - 1) // m) * m


def _equivariant_update_kernel(
    # edge-tiled input (one packed lane slab per tile)
    edge_pack_ref,
    # grid-resident inputs
    hw_stack_ref, coordT_ref, node_maskT_ref,
    w1e_ref, b1_ref, w2_ref, b2_ref, w3_row_ref,
    # output (transposed: [C, N_pad], nodes on the lane axis)
    outT_ref,
    # scratch
    trans_scr, acc_scr,
    *, use_tanh, coords_range, aggregation_method, normalization_factor,
):
    k = pl.program_id(0)
    coord_dim = coordT_ref.shape[0]
    edges_in_d = w1e_ref.shape[0]
    n_pad = coordT_ref.shape[1]

    # ---- one-time setup: zero the accumulator & scatter-LHS scratch --------
    @pl.when(k == 0)
    def _init():
        acc_scr[...] = jnp.zeros_like(acc_scr)
        trans_scr[...] = jnp.zeros_like(trans_scr)

    # ---- unpack the per-edge lane slab --------------------------------------
    # [coord_diff | edge_attr | edge_mask | valid | row_f32 | col_f32 | pad]
    pack = edge_pack_ref[...]                                   # [Et, P] f32
    off = coord_dim + edges_in_d
    coord_diff = pack[:, :coord_dim]                            # [Et, C]
    edge_attr = pack[:, coord_dim:off]                          # [Et, ed]
    edge_mask = pack[:, off:off + 1]                            # [Et, 1]
    valid = pack[:, off + 1:off + 2]                            # [Et, 1]
    row_f = pack[:, off + 2:off + 3]                            # [Et, 1]
    col_f = pack[:, off + 3:off + 4]                            # [Et, 1]

    # ---- one-hot gather / scatter matrices for this edge tile --------------
    # node ids are exact f32 integers (< 2^24), iota compare is exact;
    # one-hot 0/1 values are exact in bf16 -> bf16 MXU path is exact indexing.
    node_iota = jax.lax.broadcasted_iota(
        jnp.int32, (1, n_pad), 1).astype(jnp.float32)           # [1, Np]
    onehot_row = (row_f == node_iota).astype(jnp.bfloat16)      # [Et, Np]
    onehot_col = (col_f == node_iota).astype(jnp.bfloat16)      # [Et, Np]
    onehot_rc = jnp.concatenate([onehot_row, onehot_col], 1)    # [Et, 2Np]

    # ---- coord_mlp layer 1: fused gather of the pre-projected features -----
    # cat([h[row], h[col], edge_attr]) @ W1
    #   == (h @ W1a)[row] + (h @ W1b)[col] + edge_attr @ W1c
    # the first two terms are ONE bf16 MXU pass against the stacked hw buffer.
    h1 = jnp.dot(onehot_rc, hw_stack_ref[...],
                 preferred_element_type=jnp.float32)            # [Et, H] f32
    if edges_in_d == 1:
        h1 = h1 + edge_attr * w1e_ref[...]                      # [Et,1]*[1,H]
    else:
        h1 = h1 + jnp.dot(edge_attr, w1e_ref[...],
                          preferred_element_type=jnp.float32)
    h1 = h1 + b1_ref[...]
    h1 = h1 * jax.nn.sigmoid(h1)                                # SiLU

    h2 = jnp.dot(h1, w2_ref[...],
                 preferred_element_type=jnp.float32) + b2_ref[...]
    h2 = h2 * jax.nn.sigmoid(h2)                                # SiLU

    # final Linear(H, 1) as VPU multiply + lane reduce (XLU), not a K=1 matmul
    phi = jnp.sum(h2 * w3_row_ref[...], axis=-1, keepdims=True)  # [Et, 1]
    if use_tanh:
        phi = jnp.tanh(phi) * coords_range

    trans = coord_diff * (phi * edge_mask)                      # [Et, C]

    # Scatter LHS: static-slice writes into the persistent pre-zeroed scratch
    # (no per-step lane concatenate).  The `valid` column fuses the 'mean'
    # counts into the same MXU pass (counts ignore edge_mask, like PyTorch,
    # but exclude padded edges).
    trans_scr[:, :coord_dim] = trans
    trans_scr[:, coord_dim:coord_dim + 1] = valid

    # Lane-dense unsorted_segment_sum: contract the edge axis; nodes -> lanes.
    acc_scr[...] += jax.lax.dot_general(
        trans_scr[...].astype(jnp.bfloat16), onehot_row,
        (((0,), (0,)), ((), ())),
        preferred_element_type=jnp.float32)                     # [8, Np]

    # ---- finalize: normalize, add coord, apply node mask --------------------
    @pl.when(k == pl.num_programs(0) - 1)
    def _finalize():
        aggT = acc_scr[0:coord_dim, :]                          # [C, Np]
        if aggregation_method == 'sum':
            aggT = aggT / normalization_factor
        else:  # 'mean'
            counts = acc_scr[coord_dim:coord_dim + 1, :]        # [1, Np]
            counts = jnp.where(counts == 0.0, 1.0, counts)
            aggT = aggT / counts
        outT_ref[...] = (coordT_ref[...] + aggT) * node_maskT_ref[...]


def init_params(key, hidden_nf, edges_in_d=1):
    """Deterministic parameter init (shapes match EquivariantUpdate.__init__)."""
    k1, k2, k3, k4, k5 = jax.random.split(key, 5)
    input_edge = 2 * hidden_nf + edges_in_d
    lim1 = 1.0 / math.sqrt(input_edge)
    lim2 = 1.0 / math.sqrt(hidden_nf)
    w1 = jax.random.uniform(k1, (input_edge, hidden_nf), jnp.float32,
                            -lim1, lim1)
    b1 = jax.random.uniform(k2, (1, hidden_nf), jnp.float32, -lim1, lim1)
    w2 = jax.random.uniform(k3, (hidden_nf, hidden_nf), jnp.float32,
                            -lim2, lim2)
    b2 = jax.random.uniform(k4, (1, hidden_nf), jnp.float32, -lim2, lim2)
    xav = 0.001 * math.sqrt(6.0 / (hidden_nf + 1))
    w3 = jax.random.uniform(k5, (hidden_nf, 1), jnp.float32, -xav, xav)
    return {
        'w1h_row': w1[:hidden_nf],
        'w1h_col': w1[hidden_nf:2 * hidden_nf],
        'w1e': w1[2 * hidden_nf:],
        'b1': b1, 'w2': w2, 'b2': b2, 'w3': w3,
    }


def equivariant_update(h, coord, edge_index, coord_diff, params, edge_attr,
                       node_mask=None, edge_mask=None, *,
                       tanh=False, coords_range=10.0,
                       normalization_factor=100.0,
                       aggregation_method='sum', edge_tile=1024,
                       vmem_limit_bytes=48 * 1024 * 1024):
    f32 = jnp.float32
    bf16 = jnp.bfloat16
    row, col = edge_index
    n_nodes, coord_dim = coord.shape
    n_edges = int(row.shape[0])
    hidden_nf = h.shape[1]
    edges_in_d = edge_attr.shape[1]
    assert n_nodes < (1 << 24)  # node ids stay exact as f32

    if edge_mask is None:
        edge_mask = jnp.ones((n_edges, 1), f32)
    if node_mask is None:
        node_mask = jnp.ones((n_nodes, 1), f32)

    # ---- padding / tiling ---------------------------------------------------
    n_pad = _round_up(max(n_nodes, 1), 128)          # nodes live on lanes
    e_tile = min(_round_up(edge_tile, 8), _round_up(n_edges, 8))
    e_pad = _round_up(n_edges, e_tile)
    n_tiles = e_pad // e_tile
    acc_rows = _round_up(coord_dim + 1, 8)

    # Pack ALL narrow per-edge tensors (including row/col ids as exact f32)
    # into one lane slab -> exactly one pipelined DMA per edge tile:
    #   [coord_diff | edge_attr | edge_mask | valid | row | col | zero-pad]
    pack_w = coord_dim + edges_in_d + 4
    pack_w_pad = _round_up(pack_w, 8)
    valid = jnp.ones((n_edges, 1), f32)
    edge_pack = jnp.concatenate(
        [coord_diff.astype(f32), edge_attr.astype(f32),
         edge_mask.astype(f32), valid,
         row.astype(f32)[:, None], col.astype(f32)[:, None]], axis=1)
    edge_pack = jnp.pad(edge_pack,
                        ((0, e_pad - n_edges), (0, pack_w_pad - pack_w)))

    # Pre-project node features in the wrapper (removes the step-0 MXU bubble)
    # and stack row/col projections so the in-kernel gather is ONE matmul.
    h_p = jnp.pad(h.astype(f32), ((0, n_pad - n_nodes), (0, 0)))
    hw_stack = jnp.concatenate(
        [h_p @ params['w1h_row'].astype(f32),
         h_p @ params['w1h_col'].astype(f32)], axis=0).astype(bf16)

    coordT = jnp.pad(coord.astype(f32).T, ((0, 0), (0, n_pad - n_nodes)))
    node_maskT = jnp.pad(node_mask.astype(f32).T,
                         ((0, 0), (0, n_pad - n_nodes)))
    w3_row = params['w3'].astype(f32).T.reshape(1, hidden_nf)

    kernel = functools.partial(
        _equivariant_update_kernel,
        use_tanh=tanh, coords_range=coords_range,
        aggregation_method=aggregation_method,
        normalization_factor=normalization_factor)

    args = (edge_pack,
            hw_stack, coordT, node_maskT,
            params['w1e'].astype(f32), params['b1'].astype(f32),
            params['w2'].astype(f32), params['b2'].astype(f32), w3_row)

    edge_pack_spec = pl.BlockSpec((e_tile, pack_w_pad), lambda k: (k, 0))

    def resident(shape):
        return pl.BlockSpec(shape, lambda k: (0,) * len(shape))

    in_specs = [edge_pack_spec] + [resident(a.shape) for a in args[1:]]

    outT = pl.pallas_call(
        kernel,
        out_shape=jax.ShapeDtypeStruct((coord_dim, n_pad), f32),
        grid_spec=pltpu.PrefetchScalarGridSpec(
            num_scalar_prefetch=0,
            grid=(n_tiles,),
            in_specs=in_specs,
            out_specs=resident((coord_dim, n_pad)),
            scratch_shapes=[pltpu.VMEM((e_tile, acc_rows), f32),   # scatter LHS
                            pltpu.VMEM((acc_rows, n_pad), f32)]),  # agg+counts
        compiler_params=pltpu.CompilerParams(
            dimension_semantics=("arbitrary",),
            vmem_limit_bytes=vmem_limit_bytes),
    )(*args)

    # layout plumbing only: back to [N, C]
    return outT[:, :n_nodes].T.astype(coord.dtype)


def _reference(h, coord, edge_index, coord_diff, params, edge_attr,
               node_mask, edge_mask, *, tanh, coords_range,
               normalization_factor, aggregation_method):
    """Pure-JAX replica of the PyTorch forward for verification."""
    row, col = edge_index
    x = jnp.concatenate([h[row], h[col], edge_attr], axis=1)
    w1 = jnp.concatenate(
        [params['w1h_row'], params['w1h_col'], params['w1e']], axis=0)
    a1 = jax.nn.silu(x @ w1 + params['b1'])
    a2 = jax.nn.silu(a1 @ params['w2'] + params['b2'])
    phi = a2 @ params['w3']
    if tanh:
        phi = jnp.tanh(phi) * coords_range
    trans = coord_diff * phi
    if edge_mask is not None:
        trans = trans * edge_mask
    agg = jnp.zeros((coord.shape[0], trans.shape[1]), trans.dtype)
    agg = agg.at[row].add(trans)
    if aggregation_method == 'sum':
        agg = agg / normalization_factor
    else:
        counts = jnp.zeros((coord.shape[0], trans.shape[1]), trans.dtype)
        counts = counts.at[row].add(jnp.ones_like(trans))
        counts = jnp.where(counts == 0, 1.0, counts)
        agg = agg / counts
    out = coord + agg
    if node_mask is not None:
        out = out * node_mask
    return out


if __name__ == "__main__":
    hidden_nf = 32
    n_nodes = 8
    coord_dim = 3
    edges_in_d = 1
    coords_range = 10.0
    normalization_factor = 100.0

    key = jax.random.PRNGKey(0)
    kp, kh, kc, ka, kem, knm = jax.random.split(key, 6)
    params = init_params(kp, hidden_nf, edges_in_d)

    # fully connected directed graph without self loops: E = N*(N-1) = 56
    rows, cols = [], []
    for i in range(n_nodes):
        for j in range(n_nodes):
            if i != j:
                rows.append(i)
                cols.append(j)
    row = jnp.array(rows, dtype=jnp.int32)
    col = jnp.array(cols, dtype=jnp.int32)
    n_edges = row.shape[0]

    h = jax.random.normal(kh, (n_nodes, hidden_nf), jnp.float32)
    coord = jax.random.normal(kc, (n_nodes, coord_dim), jnp.float32)
    coord_diff = coord[row] - coord[col]
    edge_attr = jax.random.normal(ka, (n_edges, edges_in_d), jnp.float32)
    edge_mask = (jax.random.uniform(kem, (n_edges, 1)) > 0.2).astype(jnp.float32)
    node_mask = (jax.random.uniform(knm, (n_nodes, 1)) > 0.1).astype(jnp.float32)

    # small edge_tile forces a multi-step grid (56 edges -> 4 tiles of 16),
    # exercising the accumulator init / accumulate / finalize path.
    for aggregation_method, tanh in (('sum', True), ('mean', False)):
        out = equivariant_update(
            h, coord, (row, col), coord_diff, params, edge_attr,
            node_mask=node_mask, edge_mask=edge_mask,
            tanh=tanh, coords_range=coords_range,
            normalization_factor=normalization_factor,
            aggregation_method=aggregation_method, edge_tile=16)
        out = jax.block_until_ready(out)

        ref = _reference(
            h, coord, (row, col), coord_diff, params, edge_attr,
            node_mask, edge_mask, tanh=tanh, coords_range=coords_range,
            normalization_factor=normalization_factor,
            aggregation_method=aggregation_method)

        assert out.shape == (n_nodes, coord_dim)
        # bf16 is used only for the hw projections / gather / scatter operands
        # (f32 accumulation), so errors stay ~1e-5; 1e-3 leaves margin.
        assert jnp.allclose(out, ref, rtol=1e-3, atol=1e-3), (
            aggregation_method, out, ref)

    print("KERNEL_OK")
</pallas_src>

<mosaic_0001>
module attributes {stable_mosaic.version = 11 : i64} {
  func.func @_equivariant_update_kernel(%arg0: i32, %arg1: memref<16x8xf32, #tpu.memory_space<vmem>>, %arg2: memref<256x32xbf16, #tpu.memory_space<vmem>>, %arg3: memref<3x128xf32, #tpu.memory_space<vmem>>, %arg4: memref<1x128xf32, #tpu.memory_space<vmem>>, %arg5: memref<1x32xf32, #tpu.memory_space<vmem>>, %arg6: memref<1x32xf32, #tpu.memory_space<vmem>>, %arg7: memref<32x32xf32, #tpu.memory_space<vmem>>, %arg8: memref<1x32xf32, #tpu.memory_space<vmem>>, %arg9: memref<1x32xf32, #tpu.memory_space<vmem>>, %arg10: memref<3x128xf32, #tpu.memory_space<vmem>>, %arg11: memref<16x8xf32, #tpu.memory_space<vmem>>, %arg12: memref<8x128xf32, #tpu.memory_space<vmem>>) attributes {dimension_semantics = [#tpu.dimension_semantics<arbitrary>], iteration_bounds = array<i64: 4>, scalar_prefetch = 0 : i64, scratch_operands = 2 : i64, tpu.core_type = #tpu.core_type<tc>, window_params = [{transform_indices = @transform_0, window_bounds = array<i64: 16, 8>}, {pipeline_mode = #tpu.pipeline_mode<synchronous>, transform_indices = @transform_1, window_bounds = array<i64: 256, 32>}, {pipeline_mode = #tpu.pipeline_mode<synchronous>, transform_indices = @transform_2, window_bounds = array<i64: 3, 128>}, {pipeline_mode = #tpu.pipeline_mode<synchronous>, transform_indices = @transform_3, window_bounds = array<i64: 1, 128>}, {pipeline_mode = #tpu.pipeline_mode<synchronous>, transform_indices = @transform_4, window_bounds = array<i64: 1, 32>}, {pipeline_mode = #tpu.pipeline_mode<synchronous>, transform_indices = @transform_5, window_bounds = array<i64: 1, 32>}, {pipeline_mode = #tpu.pipeline_mode<synchronous>, transform_indices = @transform_6, window_bounds = array<i64: 32, 32>}, {pipeline_mode = #tpu.pipeline_mode<synchronous>, transform_indices = @transform_7, window_bounds = array<i64: 1, 32>}, {pipeline_mode = #tpu.pipeline_mode<synchronous>, transform_indices = @transform_8, window_bounds = array<i64: 1, 32>}, {pipeline_mode = #tpu.pipeline_mode<synchronous>, transform_indices = @transform_9, window_bounds = array<i64: 3, 128>}]} {
    %c0_i32 = arith.constant 0 : i32
    %0 = arith.cmpi eq, %arg0, %c0_i32 : i32
    %1 = arith.extui %0 : i1 to i32
    %c0_i32_0 = arith.constant 0 : i32
    %2 = arith.cmpi ne, %1, %c0_i32_0 : i32
    scf.if %2 {
      %cst_30 = arith.constant 0.000000e+00 : f32
      %74 = vector.broadcast %cst_30 : f32 to vector<8x128xf32>
      %c0_31 = arith.constant 0 : index
      %c0_32 = arith.constant 0 : index
      %75 = vector.load %arg12[%c0_31, %c0_32] : memref<8x128xf32, #tpu.memory_space<vmem>>, vector<8x128xf32>
      tpu.vector_store %arg12[%c0_31, %c0_32], %74 {strides = array<i32>} : memref<8x128xf32, #tpu.memory_space<vmem>>, vector<8x128xf32>,
      %cst_33 = arith.constant 0.000000e+00 : f32
      %76 = vector.broadcast %cst_33 : f32 to vector<16x8xf32>
      %c0_34 = arith.constant 0 : index
      %c0_35 = arith.constant 0 : index
      %77 = vector.load %arg11[%c0_34, %c0_35] : memref<16x8xf32, #tpu.memory_space<vmem>>, vector<16x8xf32>
      tpu.vector_store %arg11[%c0_34, %c0_35], %76 {strides = array<i32>} : memref<16x8xf32, #tpu.memory_space<vmem>>, vector<16x8xf32>,
    } else {
    }
    %c0 = arith.constant 0 : index
    %c0_1 = arith.constant 0 : index
    %3 = vector.load %arg1[%c0, %c0_1] : memref<16x8xf32, #tpu.memory_space<vmem>>, vector<16x8xf32>
    %4 = vector.extract_strided_slice %3 {offsets = [0, 0], sizes = [16, 3], strides = [1, 1]} : vector<16x8xf32> to vector<16x3xf32>
    %5 = vector.extract_strided_slice %3 {offsets = [0, 3], sizes = [16, 1], strides = [1, 1]} : vector<16x8xf32> to vector<16x1xf32>
    %6 = vector.extract_strided_slice %3 {offsets = [0, 4], sizes = [16, 1], strides = [1, 1]} : vector<16x8xf32> to vector<16x1xf32>
    %7 = vector.extract_strided_slice %3 {offsets = [0, 5], sizes = [16, 1], strides = [1, 1]} : vector<16x8xf32> to vector<16x1xf32>
    %8 = vector.extract_strided_slice %3 {offsets = [0, 6], sizes = [16, 1], strides = [1, 1]} : vector<16x8xf32> to vector<16x1xf32>
    %9 = vector.extract_strided_slice %3 {offsets = [0, 7], sizes = [16, 1], strides = [1, 1]} : vector<16x8xf32> to vector<16x1xf32>
    %10 = tpu.iota {dimensions = array<i32: 1>} : vector<1x128xi32>
    %11 = arith.sitofp %10 : vector<1x128xi32> to vector<1x128xf32>
    %12 = vector.broadcast %8 : vector<16x1xf32> to vector<16x128xf32>
    %13 = vector.broadcast %11 : vector<1x128xf32> to vector<16x128xf32>
    %14 = arith.cmpf oeq, %12, %13 : vector<16x128xf32>
    %15 = arith.extui %14 : vector<16x128xi1> to vector<16x128xi32>
    %16 = arith.sitofp %15 : vector<16x128xi32> to vector<16x128xf32>
    %17 = arith.truncf %16 : vector<16x128xf32> to vector<16x128xbf16>
    %18 = vector.broadcast %9 : vector<16x1xf32> to vector<16x128xf32>
    %19 = vector.broadcast %11 : vector<1x128xf32> to vector<16x128xf32>
    %20 = arith.cmpf oeq, %18, %19 : vector<16x128xf32>
    %21 = arith.extui %20 : vector<16x128xi1> to vector<16x128xi32>
    %22 = arith.sitofp %21 : vector<16x128xi32> to vector<16x128xf32>
    %23 = arith.truncf %22 : vector<16x128xf32> to vector<16x128xbf16>
    %24 = tpu.concatenate %17, %23 in 1 : vector<16x128xbf16>, vector<16x128xbf16> -> vector<16x256xbf16>
    %c0_2 = arith.constant 0 : index
    %c0_3 = arith.constant 0 : index
    %25 = vector.load %arg2[%c0_2, %c0_3] : memref<256x32xbf16, #tpu.memory_space<vmem>>, vector<256x32xbf16>
    %cst = arith.constant dense<0.000000e+00> : vector<16x32xf32>
    %26 = tpu.matmul %24, %25, %cst {dimension_numbers = #tpu.dot_dimension_numbers<[1], [0], [0], [1], [0, 0, 1, 1], [], []>} : vector<16x256xbf16>, vector<256x32xbf16>, vector<16x32xf32> -> vector<16x32xf32>
    %c0_4 = arith.constant 0 : index
    %c0_5 = arith.constant 0 : index
    %27 = vector.load %arg5[%c0_4, %c0_5] : memref<1x32xf32, #tpu.memory_space<vmem>>, vector<1x32xf32>
    %28 = vector.broadcast %5 : vector<16x1xf32> to vector<16x32xf32>
    %29 = vector.broadcast %27 : vector<1x32xf32> to vector<16x32xf32>
    %30 = arith.mulf %28, %29 : vector<16x32xf32>
    %31 = arith.addf %26, %30 : vector<16x32xf32>
    %c0_6 = arith.constant 0 : index
    %c0_7 = arith.constant 0 : index
    %32 = vector.load %arg6[%c0_6, %c0_7] : memref<1x32xf32, #tpu.memory_space<vmem>>, vector<1x32xf32>
    %33 = vector.broadcast %32 : vector<1x32xf32> to vector<16x32xf32>
    %34 = arith.addf %31, %33 : vector<16x32xf32>
    %35 = arith.negf %34 : vector<16x32xf32>
    %36 = math.exp %35 : vector<16x32xf32>
    %cst_8 = arith.constant 1.000000e+00 : f32
    %37 = vector.broadcast %cst_8 : f32 to vector<16x32xf32>
    %38 = arith.addf %37, %36 : vector<16x32xf32>
    %39 = arith.divf %37, %38 : vector<16x32xf32>
    %40 = arith.mulf %34, %39 : vector<16x32xf32>
    %c0_9 = arith.constant 0 : index
    %c0_10 = arith.constant 0 : index
    %41 = vector.load %arg7[%c0_9, %c0_10] : memref<32x32xf32, #tpu.memory_space<vmem>>, vector<32x32xf32>
    %cst_11 = arith.constant dense<0.000000e+00> : vector<16x32xf32>
    %42 = tpu.matmul %40, %41, %cst_11 {dimension_numbers = #tpu.dot_dimension_numbers<[1], [0], [0], [1], [0, 0, 1, 1], [], []>} : vector<16x32xf32>, vector<32x32xf32>, vector<16x32xf32> -> vector<16x32xf32>
    %c0_12 = arith.constant 0 : index
    %c0_13 = arith.constant 0 : index
    %43 = vector.load %arg8[%c0_12, %c0_13] : memref<1x32xf32, #tpu.memory_space<vmem>>, vector<1x32xf32>
    %44 = vector.broadcast %43 : vector<1x32xf32> to vector<16x32xf32>
    %45 = arith.addf %42, %44 : vector<16x32xf32>
    %46 = arith.negf %45 : vector<16x32xf32>
    %47 = math.exp %46 : vector<16x32xf32>
    %cst_14 = arith.constant 1.000000e+00 : f32
    %48 = vector.broadcast %cst_14 : f32 to vector<16x32xf32>
    %49 = arith.addf %48, %47 : vector<16x32xf32>
    %50 = arith.divf %48, %49 : vector<16x32xf32>
    %51 = arith.mulf %45, %50 : vector<16x32xf32>
    %c0_15 = arith.constant 0 : index
    %c0_16 = arith.constant 0 : index
    %52 = vector.load %arg9[%c0_15, %c0_16] : memref<1x32xf32, #tpu.memory_space<vmem>>, vector<1x32xf32>
    %53 = vector.broadcast %52 : vector<1x32xf32> to vector<16x32xf32>
    %54 = arith.mulf %51, %53 : vector<16x32xf32>
    %cst_17 = arith.constant dense<0.000000e+00> : vector<16xf32>
    %55 = vector.multi_reduction <add>, %54, %cst_17 [1] : vector<16x32xf32> to vector<16xf32>
    %56 = vector.shape_cast %55 : vector<16xf32> to vector<16x1xf32>
    %57 = math.tanh %56 : vector<16x1xf32>
    %cst_18 = arith.constant 1.000000e+01 : f32
    %58 = vector.broadcast %cst_18 : f32 to vector<16x1xf32>
    %59 = arith.mulf %57, %58 : vector<16x1xf32>
    %60 = arith.mulf %59, %6 : vector<16x1xf32>
    %61 = vector.broadcast %60 : vector<16x1xf32> to vector<16x3xf32>
    %62 = arith.mulf %4, %61 : vector<16x3xf32>
    %c0_19 = arith.constant 0 : index
    %c0_20 = arith.constant 0 : index
    %63 = vector.load %arg11[%c0_19, %c0_20] : memref<16x8xf32, #tpu.memory_space<vmem>>, vector<16x3xf32>
    tpu.vector_store %arg11[%c0_19, %c0_20], %62 {strides = array<i32>} : memref<16x8xf32, #tpu.memory_space<vmem>>, vector<16x3xf32>,
    %c0_21 = arith.constant 0 : index
    %c3 = arith.constant 3 : index
    %64 = vector.load %arg11[%c0_21, %c3] : memref<16x8xf32, #tpu.memory_space<vmem>>, vector<16x1xf32>
    tpu.vector_store %arg11[%c0_21, %c3], %7 {strides = array<i32>} : memref<16x8xf32, #tpu.memory_space<vmem>>, vector<16x1xf32>,
    %c0_22 = arith.constant 0 : index
    %c0_23 = arith.constant 0 : index
    %65 = vector.load %arg12[%c0_22, %c0_23] : memref<8x128xf32, #tpu.memory_space<vmem>>, vector<8x128xf32>
    %c0_24 = arith.constant 0 : index
    %c0_25 = arith.constant 0 : index
    %66 = vector.load %arg11[%c0_24, %c0_25] : memref<16x8xf32, #tpu.memory_space<vmem>>, vector<16x8xf32>
    %67 = arith.truncf %66 : vector<16x8xf32> to vector<16x8xbf16>
    %cst_26 = arith.constant dense<0.000000e+00> : vector<8x128xf32>
    %68 = tpu.matmul %67, %17, %cst_26 {dimension_numbers = #tpu.dot_dimension_numbers<[0], [0], [1], [1], [0, 1, 1, 1], [], []>} : vector<16x8xbf16>, vector<16x128xbf16>, vector<8x128xf32> -> vector<8x128xf32>
    %69 = arith.addf %65, %68 : vector<8x128xf32>
    %c0_27 = arith.constant 0 : index
    %c0_28 = arith.constant 0 : index
    %70 = vector.load %arg12[%c0_27, %c0_28] : memref<8x128xf32, #tpu.memory_space<vmem>>, vector<8x128xf32>
    tpu.vector_store %arg12[%c0_27, %c0_28], %69 {strides = array<i32>} : memref<8x128xf32, #tpu.memory_space<vmem>>, vector<8x128xf32>,
    %c3_i32 = arith.constant 3 : i32
    %71 = arith.cmpi eq, %arg0, %c3_i32 : i32
    %72 = arith.extui %71 : i1 to i32
    %c0_i32_29 = arith.constant 0 : i32
    %73 = arith.cmpi ne, %72, %c0_i32_29 : i32
    scf.if %73 {
      %c0_30 = arith.constant 0 : index
      %c0_31 = arith.constant 0 : index
      %74 = vector.load %arg12[%c0_30, %c0_31] : memref<8x128xf32, #tpu.memory_space<vmem>>, vector<3x128xf32>
      %cst_32 = arith.constant 1.000000e+02 : f32
      %75 = vector.broadcast %cst_32 : f32 to vector<3x128xf32>
      %76 = arith.divf %74, %75 : vector<3x128xf32>
      %c0_33 = arith.constant 0 : index
      %c0_34 = arith.constant 0 : index
      %77 = vector.load %arg3[%c0_33, %c0_34] : memref<3x128xf32, #tpu.memory_space<vmem>>, vector<3x128xf32>
      %78 = arith.addf %77, %76 : vector<3x128xf32>
      %c0_35 = arith.constant 0 : index
      %c0_36 = arith.constant 0 : index
      %79 = vector.load %arg4[%c0_35, %c0_36] : memref<1x128xf32, #tpu.memory_space<vmem>>, vector<1x128xf32>
      %80 = vector.broadcast %79 : vector<1x128xf32> to vector<3x128xf32>
      %81 = arith.mulf %78, %80 : vector<3x128xf32>
      %c0_37 = arith.constant 0 : index
      %c0_38 = arith.constant 0 : index
      %82 = vector.load %arg10[%c0_37, %c0_38] : memref<3x128xf32, #tpu.memory_space<vmem>>, vector<3x128xf32>
      tpu.vector_store %arg10[%c0_37, %c0_38], %81 {strides = array<i32>} : memref<3x128xf32, #tpu.memory_space<vmem>>, vector<3x128xf32>,
    } else {
    }
    return
  }
  func.func @transform_0(%arg0: i32) -> (i32, i32) {
    %c0_i32 = arith.constant 0 : i32
    %c0_i32_0 = arith.constant 0 : i32
    return %arg0, %c0_i32 : i32, i32
  }
  func.func @transform_1(%arg0: i32) -> (i32, i32) {
    %c0_i32 = arith.constant 0 : i32
    %c0_i32_0 = arith.constant 0 : i32
    %c0_i32_1 = arith.constant 0 : i32
    return %c0_i32, %c0_i32_0 : i32, i32
  }
  func.func @transform_2(%arg0: i32) -> (i32, i32) {
    %c0_i32 = arith.constant 0 : i32
    %c0_i32_0 = arith.constant 0 : i32
    %c0_i32_1 = arith.constant 0 : i32
    return %c0_i32, %c0_i32_0 : i32, i32
  }
  func.func @transform_3(%arg0: i32) -> (i32, i32) {
    %c0_i32 = arith.constant 0 : i32
    %c0_i32_0 = arith.constant 0 : i32
    %c0_i32_1 = arith.constant 0 : i32
    return %c0_i32, %c0_i32_0 : i32, i32
  }
  func.func @transform_4(%arg0: i32) -> (i32, i32) {
    %c0_i32 = arith.constant 0 : i32
    %c0_i32_0 = arith.constant 0 : i32
    %c0_i32_1 = arith.constant 0 : i32
    return %c0_i32, %c0_i32_0 : i32, i32
  }
  func.func @transform_5(%arg0: i32) -> (i32, i32) {
    %c0_i32 = arith.constant 0 : i32
    %c0_i32_0 = arith.constant 0 : i32
    %c0_i32_1 = arith.constant 0 : i32
    return %c0_i32, %c0_i32_0 : i32, i32
  }
  func.func @transform_6(%arg0: i32) -> (i32, i32) {
    %c0_i32 = arith.constant 0 : i32
    %c0_i32_0 = arith.constant 0 : i32
    %c0_i32_1 = arith.constant 0 : i32
    return %c0_i32, %c0_i32_0 : i32, i32
  }
  func.func @transform_7(%arg0: i32) -> (i32, i32) {
    %c0_i32 = arith.constant 0 : i32
    %c0_i32_0 = arith.constant 0 : i32
    %c0_i32_1 = arith.constant 0 : i32
    return %c0_i32, %c0_i32_0 : i32, i32
  }
  func.func @transform_8(%arg0: i32) -> (i32, i32) {
    %c0_i32 = arith.constant 0 : i32
    %c0_i32_0 = arith.constant 0 : i32
    %c0_i32_1 = arith.constant 0 : i32
    return %c0_i32, %c0_i32_0 : i32, i32
  }
  func.func @transform_9(%arg0: i32) -> (i32, i32) {
    %c0_i32 = arith.constant 0 : i32
    %c0_i32_0 = arith.constant 0 : i32
    %c0_i32_1 = arith.constant 0 : i32
    return %c0_i32, %c0_i32_0 : i32, i32
  }
}

</mosaic_0001>

<llo_original>
// kernel: tpu_custom_call.1
$region0: #{tpu_custom_call.1}
  #allocation0 [shape = 'u32[]', space=smem, size = 0x4, offset = 0x4, fixed_abs, tag = 'smem constant byte address 0x4 - core index']
  #allocation1 [shape = 'u32[72,128]{1,0:T(1,128)}', space=vmem, size = 0x9000, scoped, tag = 'internal scratch']
  #allocation2 [shape = 'f32[16,8]{1,0:T(8,128)}', space=vmem, size = 0x2000, scoped, tag = 'scratch operand']
  #allocation3 [shape = 'f32[8,128]{1,0:T(8,128)}', space=vmem, size = 0x1000, scoped, tag = 'scratch operand']
  %s0 = inlined_call_operand.vmem [shape: f32[64,8], index: 0, kind: input, shape index: {}]
  %s1 = inlined_call_operand.vmem [shape: bf16[256,32], index: 1, kind: input, shape index: {}]
  %s2 = inlined_call_operand.vmem [shape: f32[3,128], index: 2, kind: input, shape index: {}]
  %s3 = inlined_call_operand.vmem [shape: f32[1,128], index: 3, kind: input, shape index: {}]
  %s4 = inlined_call_operand.vmem [shape: f32[1,32], index: 4, kind: input, shape index: {}]
  %s5 = inlined_call_operand.vmem [shape: f32[1,32], index: 5, kind: input, shape index: {}]
  %s6 = inlined_call_operand.vmem [shape: f32[32,32], index: 6, kind: input, shape index: {}]
  %s7 = inlined_call_operand.vmem [shape: f32[1,32], index: 7, kind: input, shape index: {}]
  %s8 = inlined_call_operand.vmem [shape: f32[1,32], index: 8, kind: input, shape index: {}]
  %s9 = inlined_call_operand.hbm [shape: f32[3,128], index: 9, kind: output, shape index: {}]
  %s10 = sld [smem:[#allocation0]]
  $region77: #{tpu_custom_call.1} parent=0
    _
  %s12 = ssub.s32 1, %s10
  %s13 = scalar_select 0, %s12, %s10
  $region1: #{tpu_custom_call.1} parent=0
    #allocation4 [shape = 'u8[2048]{0}', space=vmem, size = 0x800, scoped, tag = 'output window, operand 0, single buffered']
    #allocation5 [shape = 's32[2]{0}', space=sflag, size = 0x8, scoped, tag = 'scoped memory for tpu_custom_call.1']
    %14 = vsyncpa [#allocation5], 0
    loop: start=0, step=1, limit=6
    $region2: #{tpu_custom_call.1} parent=1 // loop_pre_header
      _
    $region3: #{tpu_custom_call.1} parent=1 // loop_header
      %s16 = sphi 0, %s20
      %p17 = scmp.ge.s32.totalorder %s16, 6
      %s26 = sphi 0, %s28
      %s29 = sphi 0, %s26
      %s30 = sphi 0, %s29
      %s46 = sphi 0, %s30
      %s50 = sphi 0, %s50
      %s52 = sphi 0, %s50
      %s53 = sphi 0, %s52
      %s67 = sphi 0, %s53
      %s71 = sphi 0, %s71
      %s73 = sphi 0, %s71
      %s74 = sphi 0, %s73
      %s88 = sphi 0, %s74
      %s92 = sphi 0, %s92
      %s94 = sphi 0, %s92
      %s95 = sphi 0, %s94
      %s109 = sphi 0, %s95
      %s113 = sphi 0, %s113
      %s115 = sphi 0, %s113
      %s116 = sphi 0, %s115
      %s130 = sphi 0, %s116
      %s134 = sphi 0, %s134
      %s136 = sphi 0, %s134
      %s137 = sphi 0, %s136
      %s151 = sphi 0, %s137
      %s155 = sphi 0, %s155
      %s157 = sphi 0, %s155
      %s158 = sphi 0, %s157
      %s172 = sphi 0, %s158
      %s176 = sphi 0, %s176
      %s178 = sphi 0, %s176
      %s179 = sphi 0, %s178
      %s193 = sphi 0, %s179
      %s197 = sphi 0, %s197
      %s199 = sphi 0, %s197
      %s200 = sphi 0, %s199
      %s214 = sphi 0, %s200
      %s218 = sphi 0, %s218
      %s220 = sphi 0, %s218
      %s221 = sphi 0, %s220
      %s235 = sphi 0, %s221
    $region4: #{tpu_custom_call.1} parent=1 // loop_header_branch
      %19 = sbr.rel (%p17) target = $region8
    $region5: #{tpu_custom_call.1} parent=1 // loop_body
      %s21 = ssub.s32 %s16, 1
      %s22 = ssub.s32 %s16, 2
      %s23 = sadd.s32 %s16, 1
      %s24 = ssub.s32 %s16, %s23
      %p25 = scmp.eq.s32.totalorder %s24, 0
      %s27 = sadd.s32 %s26, 1
      %s28 = scalar_select %p25, %s26, %s27
      %p31 = pneg %p25
      %p32 = scmp.eq.s32.totalorder %s16, 3
      %p33 = por %p31, %p32
      %p34 = scmp.ne.s32.totalorder %s26, %s29
      %p35 = scmp.eq.s32.totalorder %s16, 0
      %p36 = por %p34, %p35
      %p37 = scmp.ne.s32.totalorder %s26, %s29
      %p38 = scmp.eq.s32.totalorder %s21, 3
      %p39 = por %p37, %p38
      %p40 = scmp.ne.s32.totalorder %s29, %s30
      %p41 = scmp.eq.s32.totalorder %s21, 0
      %p42 = por %p40, %p41
      %p43 = scmp.ne.s32.totalorder %s29, %s30
      %p44 = scmp.eq.s32.totalorder %s22, 3
      %p45 = por %p43, %p44
      %p47 = scmp.ne.s32.totalorder %s30, %s46
      %p48 = scmp.eq.s32.totalorder %s22, 0
      %p49 = por %p47, %p48
      %s51 = sadd.s32 %s50, 1
      %p54 = scmp.eq.s32.totalorder %s16, 3
      %p55 = scmp.ne.s32.totalorder %s50, %s52
      %p56 = scmp.eq.s32.totalorder %s16, 0
      %p57 = por %p55, %p56
      %p58 = scmp.ne.s32.totalorder %s50, %s52
      %p59 = scmp.eq.s32.totalorder %s21, 3
      %p60 = por %p58, %p59
      %p61 = scmp.ne.s32.totalorder %s52, %s53
      %p62 = scmp.eq.s32.totalorder %s21, 0
      %p63 = por %p61, %p62
      %p64 = scmp.ne.s32.totalorder %s52, %s53
      %p65 = scmp.eq.s32.totalorder %s22, 3
      %p66 = por %p64, %p65
      %p68 = scmp.ne.s32.totalorder %s53, %s67
      %p69 = scmp.eq.s32.totalorder %s22, 0
      %p70 = por %p68, %p69
      %s72 = sadd.s32 %s71, 1
      %p75 = scmp.eq.s32.totalorder %s16, 3
      %p76 = scmp.ne.s32.totalorder %s71, %s73
      %p77 = scmp.eq.s32.totalorder %s16, 0
      %p78 = por %p76, %p77
      %p79 = scmp.ne.s32.totalorder %s71, %s73
      %p80 = scmp.eq.s32.totalorder %s21, 3
      %p81 = por %p79, %p80
      %p82 = scmp.ne.s32.totalorder %s73, %s74
      %p83 = scmp.eq.s32.totalorder %s21, 0
      %p84 = por %p82, %p83
      %p85 = scmp.ne.s32.totalorder %s73, %s74
      %p86 = scmp.eq.s32.totalorder %s22, 3
      %p87 = por %p85, %p86
      %p89 = scmp.ne.s32.totalorder %s74, %s88
      %p90 = scmp.eq.s32.totalorder %s22, 0
      %p91 = por %p89, %p90
      %s93 = sadd.s32 %s92, 1
      %p96 = scmp.eq.s32.totalorder %s16, 3
      %p97 = scmp.ne.s32.totalorder %s92, %s94
      %p98 = scmp.eq.s32.totalorder %s16, 0
      %p99 = por %p97, %p98
      %p100 = scmp.ne.s32.totalorder %s92, %s94
      %p101 = scmp.eq.s32.totalorder %s21, 3
      %p102 = por %p100, %p101
      %p103 = scmp.ne.s32.totalorder %s94, %s95
      %p104 = scmp.eq.s32.totalorder %s21, 0
      %p105 = por %p103, %p104
      %p106 = scmp.ne.s32.totalorder %s94, %s95
      %p107 = scmp.eq.s32.totalorder %s22, 3
      %p108 = por %p106, %p107
      %p110 = scmp.ne.s32.totalorder %s95, %s109
      %p111 = scmp.eq.s32.totalorder %s22, 0
      %p112 = por %p110, %p111
      %s114 = sadd.s32 %s113, 1
      %p117 = scmp.eq.s32.totalorder %s16, 3
      %p118 = scmp.ne.s32.totalorder %s113, %s115
      %p119 = scmp.eq.s32.totalorder %s16, 0
      %p120 = por %p118, %p119
      %p121 = scmp.ne.s32.totalorder %s113, %s115
      %p122 = scmp.eq.s32.totalorder %s21, 3
      %p123 = por %p121, %p122
      %p124 = scmp.ne.s32.totalorder %s115, %s116
      %p125 = scmp.eq.s32.totalorder %s21, 0
      %p126 = por %p124, %p125
      %p127 = scmp.ne.s32.totalorder %s115, %s116
      %p128 = scmp.eq.s32.totalorder %s22, 3
      %p129 = por %p127, %p128
      %p131 = scmp.ne.s32.totalorder %s116, %s130
      %p132 = scmp.eq.s32.totalorder %s22, 0
      %p133 = por %p131, %p132
      %s135 = sadd.s32 %s134, 1
      %p138 = scmp.eq.s32.totalorder %s16, 3
      %p139 = scmp.ne.s32.totalorder %s134, %s136
      %p140 = scmp.eq.s32.totalorder %s16, 0
      %p141 = por %p139, %p140
      %p142 = scmp.ne.s32.totalorder %s134, %s136
      %p143 = scmp.eq.s32.totalorder %s21, 3
      %p144 = por %p142, %p143
      %p145 = scmp.ne.s32.totalorder %s136, %s137
      %p146 = scmp.eq.s32.totalorder %s21, 0
      %p147 = por %p145, %p146
      %p148 = scmp.ne.s32.totalorder %s136, %s137
      %p149 = scmp.eq.s32.totalorder %s22, 3
      %p150 = por %p148, %p149
      %p152 = scmp.ne.s32.totalorder %s137, %s151
      %p153 = scmp.eq.s32.totalorder %s22, 0
      %p154 = por %p152, %p153
      %s156 = sadd.s32 %s155, 1
      %p159 = scmp.eq.s32.totalorder %s16, 3
      %p160 = scmp.ne.s32.totalorder %s155, %s157
      %p161 = scmp.eq.s32.totalorder %s16, 0
      %p162 = por %p160, %p161
      %p163 = scmp.ne.s32.totalorder %s155, %s157
      %p164 = scmp.eq.s32.totalorder %s21, 3
      %p165 = por %p163, %p164
      %p166 = scmp.ne.s32.totalorder %s157, %s158
      %p167 = scmp.eq.s32.totalorder %s21, 0
      %p168 = por %p166, %p167
      %p169 = scmp.ne.s32.totalorder %s157, %s158
      %p170 = scmp.eq.s32.totalorder %s22, 3
      %p171 = por %p169, %p170
      %p173 = scmp.ne.s32.totalorder %s158, %s172
      %p174 = scmp.eq.s32.totalorder %s22, 0
      %p175 = por %p173, %p174
      %s177 = sadd.s32 %s176, 1
      %p180 = scmp.eq.s32.totalorder %s16, 3
      %p181 = scmp.ne.s32.totalorder %s176, %s178
      %p182 = scmp.eq.s32.totalorder %s16, 0
      %p183 = por %p181, %p182
      %p184 = scmp.ne.s32.totalorder %s176, %s178
      %p185 = scmp.eq.s32.totalorder %s21, 3
      %p186 = por %p184, %p185
      %p187 = scmp.ne.s32.totalorder %s178, %s179
      %p188 = scmp.eq.s32.totalorder %s21, 0
      %p189 = por %p187, %p188
      %p190 = scmp.ne.s32.totalorder %s178, %s179
      %p191 = scmp.eq.s32.totalorder %s22, 3
      %p192 = por %p190, %p191
      %p194 = scmp.ne.s32.totalorder %s179, %s193
      %p195 = scmp.eq.s32.totalorder %s22, 0
      %p196 = por %p194, %p195
      %s198 = sadd.s32 %s197, 1
      %p201 = scmp.eq.s32.totalorder %s16, 3
      %p202 = scmp.ne.s32.totalorder %s197, %s199
      %p203 = scmp.eq.s32.totalorder %s16, 0
      %p204 = por %p202, %p203
      %p205 = scmp.ne.s32.totalorder %s197, %s199
      %p206 = scmp.eq.s32.totalorder %s21, 3
      %p207 = por %p205, %p206
      %p208 = scmp.ne.s32.totalorder %s199, %s200
      %p209 = scmp.eq.s32.totalorder %s21, 0
      %p210 = por %p208, %p209
      %p211 = scmp.ne.s32.totalorder %s199, %s200
      %p212 = scmp.eq.s32.totalorder %s22, 3
      %p213 = por %p211, %p212
      %p215 = scmp.ne.s32.totalorder %s200, %s214
      %p216 = scmp.eq.s32.totalorder %s22, 0
      %p217 = por %p215, %p216
      %s219 = sadd.s32 %s218, 1
      %p222 = scmp.eq.s32.totalorder %s16, 3
      %p223 = scmp.ne.s32.totalorder %s218, %s220
      %p224 = scmp.eq.s32.totalorder %s16, 0
      %p225 = por %p223, %p224
      %p226 = scmp.ne.s32.totalorder %s218, %s220
      %p227 = scmp.eq.s32.totalorder %s21, 3
      %p228 = por %p226, %p227
      %p229 = scmp.ne.s32.totalorder %s220, %s221
      %p230 = scmp.eq.s32.totalorder %s21, 0
      %p231 = por %p229, %p230
      %p232 = scmp.ne.s32.totalorder %s220, %s221
      %p233 = scmp.eq.s32.totalorder %s22, 3
      %p234 = por %p232, %p233
      %p236 = scmp.ne.s32.totalorder %s221, %s235
      %p237 = scmp.eq.s32.totalorder %s22, 0
      %p238 = por %p236, %p237
      %p239 = scmp.le.s32.totalorder 1, %s16
      %p240 = scmp.lt.s32.totalorder %s16, 5
      %p241 = pnand %p239, %p240
      %p242 = pneg %p241
      // Predicated region
      $region9: #{tpu_custom_call.1} parent=5 // pred_check
        _
      $region10: #{tpu_custom_call.1} parent=5 // pred_check_branch
        %244 = sbr.rel (%p241) target = $region12
      $region11: #{tpu_custom_call.1} parent=5 // pred_region
        %s245 = ssub.s32 %s16, 1
        // Predicated region
        $region13: #{tpu_custom_call.1} parent=11 // pred_check
          %p246 = pneg %p63
        $region14: #{tpu_custom_call.1} parent=11 // pred_check_branch
          %248 = sbr.rel (%p246) target = $region16
        $region15: #{tpu_custom_call.1} parent=11 // pred_region
          _
        $region16: #{tpu_custom_call.1} parent=11 // pred_fallthru
          _
        // Predicated region
        $region17: #{tpu_custom_call.1} parent=11 // pred_check
          %p249 = pneg %p84
        $region18: #{tpu_custom_call.1} parent=11 // pred_check_branch
          %251 = sbr.rel (%p249) target = $region20
        $region19: #{tpu_custom_call.1} parent=11 // pred_region
          _
        $region20: #{tpu_custom_call.1} parent=11 // pred_fallthru
          _
        // Predicated region
        $region21: #{tpu_custom_call.1} parent=11 // pred_check
          %p252 = pneg %p105
        $region22: #{tpu_custom_call.1} parent=11 // pred_check_branch
          %254 = sbr.rel (%p252) target = $region24
        $region23: #{tpu_custom_call.1} parent=11 // pred_region
          _
        $region24: #{tpu_custom_call.1} parent=11 // pred_fallthru
          _
        // Predicated region
        $region25: #{tpu_custom_call.1} parent=11 // pred_check
          %p255 = pneg %p126
        $region26: #{tpu_custom_call.1} parent=11 // pred_check_branch
          %257 = sbr.rel (%p255) target = $region28
        $region27: #{tpu_custom_call.1} parent=11 // pred_region
          _
        $region28: #{tpu_custom_call.1} parent=11 // pred_fallthru
          _
        // Predicated region
        $region29: #{tpu_custom_call.1} parent=11 // pred_check
          %p258 = pneg %p147
        $region30: #{tpu_custom_call.1} parent=11 // pred_check_branch
          %260 = sbr.rel (%p258) target = $region32
        $region31: #{tpu_custom_call.1} parent=11 // pred_region
          _
        $region32: #{tpu_custom_call.1} parent=11 // pred_fallthru
          _
        // Predicated region
        $region33: #{tpu_custom_call.1} parent=11 // pred_check
          %p261 = pneg %p168
        $region34: #{tpu_custom_call.1} parent=11 // pred_check_branch
          %263 = sbr.rel (%p261) target = $region36
        $region35: #{tpu_custom_call.1} parent=11 // pred_region
          _
        $region36: #{tpu_custom_call.1} parent=11 // pred_fallthru
          _
        // Predicated region
        $region37: #{tpu_custom_call.1} parent=11 // pred_check
          %p264 = pneg %p189
        $region38: #{tpu_custom_call.1} parent=11 // pred_check_branch
          %266 = sbr.rel (%p264) target = $region40
        $region39: #{tpu_custom_call.1} parent=11 // pred_region
          _
        $region40: #{tpu_custom_call.1} parent=11 // pred_fallthru
          _
        // Predicated region
        $region41: #{tpu_custom_call.1} parent=11 // pred_check
          %p267 = pneg %p210
        $region42: #{tpu_custom_call.1} parent=11 // pred_check_branch
          %269 = sbr.rel (%p267) target = $region44
        $region43: #{tpu_custom_call.1} parent=11 // pred_region
          _
        $region44: #{tpu_custom_call.1} parent=11 // pred_fallthru
          _
      $region12: #{tpu_custom_call.1} parent=5 // pred_fallthru
        _
      %p270 = scmp.lt.s32.totalorder %s16, 4
      // Predicated region
      $region45: #{tpu_custom_call.1} parent=5 // pred_check
        %p271 = pneg %p270
      $region46: #{tpu_custom_call.1} parent=5 // pred_check_branch
        %273 = sbr.rel (%p271) target = $region48
      $region47: #{tpu_custom_call.1} parent=5 // pred_region
        // Predicated region
        $region49: #{tpu_custom_call.1} parent=47 // pred_check
          %p274 = pneg %p36
        $region50: #{tpu_custom_call.1} parent=47 // pred_check_branch
          %276 = sbr.rel (%p274) target = $region52
        $region51: #{tpu_custom_call.1} parent=47 // pred_region
          %s277 = smul.u32 2, %s16
          %p278 = scmp.lt.s32.totalorder %s277, 7
          %s279 = scalar_select %p278, %s277, 7
          %s280 = smul.addr %s279, 8
          %s281 = scalar_lea.vmem %s0, %s280
          %s282 = smul.u32 2, %s16
        $region52: #{tpu_custom_call.1} parent=47 // pred_fallthru
          _
      $region48: #{tpu_custom_call.1} parent=5 // pred_fallthru
        _
      %p283 = scmp.le.s32.totalorder 1, %s16
      %p284 = scmp.lt.s32.totalorder %s16, 5
      %p285 = pnand %p283, %p284
      %p286 = pneg %p285
      // Predicated region
      $region53: #{tpu_custom_call.1} parent=5 // pred_check
        _
      $region54: #{tpu_custom_call.1} parent=5 // pred_check_branch
        %288 = sbr.rel (%p285) target = $region56
      $region55: #{tpu_custom_call.1} parent=5 // pred_region
        %s289 = ssub.s32 %s16, 1
        %s290 = smul.u32 2, %s21
        %p291 = scmp.lt.s32.totalorder %s290, 7
        %s292 = scalar_select %p291, %s290, 7
        %s293 = smul.addr %s292, 8
        %s294 = scalar_lea.vmem %s0, %s293
        %p295 = pneg %p42
        %p296 = pneg %p39
        %p297 = pneg %p63
        %p298 = pneg %p60
        %p299 = pneg %p84
        %p300 = pneg %p81
        %p301 = pneg %p105
        %p302 = pneg %p102
        %p303 = pneg %p126
        %p304 = pneg %p123
        %p305 = pneg %p147
        %p306 = pneg %p144
        %p307 = pneg %p168
        %p308 = pneg %p165
        %p309 = pneg %p189
        %p310 = pneg %p186
        %p311 = pneg %p210
        %p312 = pneg %p207
        %p313 = pneg %p231
        %p314 = pneg %p228
        %s315 = smul.u32 2, %s21
        %p316 = scmp.lt.s32.totalorder %s315, 7
        %s317 = scalar_select %p316, %s315, 7
        %s318 = smul.addr %s317, 8
        %s319 = scalar_lea.vmem %s0, %s318
        %s320 = smul.u32 2, %s21
        %p322 = scmp.eq.s32.totalorder %s21, 0
        // Predicated region
        $region57: #{tpu_custom_call.1} parent=55 // pred_check
          %p323 = pneg %p322
        $region58: #{tpu_custom_call.1} parent=55 // pred_check_branch
          %325 = sbr.rel (%p323) target = $region60
        $region59: #{tpu_custom_call.1} parent=55 // pred_region
          %326 = vst [vmem:[#allocation3] sm:$0xff] 0.0
          %vm327 = vcmask 64512
          %328 = vst.msk [vmem:[#allocation2] sm:$0xff] %vm327, 0.0
          %329 = vst.msk [vmem:[#allocation2 + $0x8] sm:$0xff] %vm327, 0.0
        $region60: #{tpu_custom_call.1} parent=55 // pred_fallthru
          _
        %v330 = vld [vmem:[%s319] sm:$0xff]
        %v331 = vld [vmem:[%s319 + $0x8] sm:$0xff]
        %v332 = vlaneseq
        %v333 = vand.u32 %v332, 127
        %v334 = vcvt.s32.f32 %v333
        %336 = vset.pattern.permute.xlu0 6
        %337 = vperm.xlu0 %336, %v330
        %v338 = vpop.permute.xlu0 %337
        %341 = vset.pattern.permute.xlu0 6
        %342 = vperm.xlu0 %341, %v331
        %v343 = vpop.permute.xlu0 %342
        %vm345 = vcmp.eq.f32.partialorder %v338, %v334
        %vm346 = vcmp.eq.f32.partialorder %v343, %v334
        %v347 = vsel %vm345, 1, 0
        %v348 = vsel %vm346, 1, 0
        %v349 = vcvt.s32.f32 %v347
        %v350 = vcvt.s32.f32 %v348
        %v351 = vpack.c.bf16 %v349, %v349
        %v352 = vpack.c.bf16 %v350, %v350
        %353 = vset.pattern.permute.xlu0 7
        %354 = vperm.xlu0 %353, %v330
        %v355 = vpop.permute.xlu0 %354
        %357 = vset.pattern.permute.xlu0 7
        %358 = vperm.xlu0 %357, %v331
        %v359 = vpop.permute.xlu0 %358
        %vm361 = vcmp.eq.f32.partialorder %v355, %v334
        %vm362 = vcmp.eq.f32.partialorder %v359, %v334
        %v363 = vsel %vm361, 1, 0
        %v364 = vsel %vm362, 1, 0
        %v365 = vcvt.s32.f32 %v363
        %v366 = vcvt.s32.f32 %v364
        %v367 = vpack.c.bf16 %v365, %v365
        %v368 = vpack.c.bf16 %v366, %v366
        %v371 = vunpack.c.l.b16 %v351
        %v372 = vunpack.c.l.b16 %v352
        %v373 = vpack.c.b16 %v372, %v371
        %v377 = vunpack.c.l.b16 %v367
        %v378 = vunpack.c.l.b16 %v368
        %v379 = vpack.c.b16 %v378, %v377
        %v381 = vld [vmem:[%s1] sm:$0xf]
        %v382 = vld [vmem:[%s1 + $0x4] sm:$0xf]
        %v383 = vld [vmem:[%s1 + $0x8] sm:$0xf]
        %v384 = vld [vmem:[%s1 + $0xc] sm:$0xf]
        %v385 = vld [vmem:[%s1 + $0x10] sm:$0xf]
        %v386 = vld [vmem:[%s1 + $0x14] sm:$0xf]
        %v387 = vld [vmem:[%s1 + $0x18] sm:$0xf]
        %v388 = vld [vmem:[%s1 + $0x1c] sm:$0xf]
        %v389 = vld [vmem:[%s1 + $0x20] sm:$0xf]
        %v390 = vld [vmem:[%s1 + $0x24] sm:$0xf]
        %v391 = vld [vmem:[%s1 + $0x28] sm:$0xf]
        %v392 = vld [vmem:[%s1 + $0x2c] sm:$0xf]
        %v393 = vld [vmem:[%s1 + $0x30] sm:$0xf]
        %v394 = vld [vmem:[%s1 + $0x34] sm:$0xf]
        %v395 = vld [vmem:[%s1 + $0x38] sm:$0xf]
        %v396 = vld [vmem:[%s1 + $0x3c] sm:$0xf]
        %v397 = vld [vmem:[%s1 + $0x40] sm:$0xf]
        %v398 = vld [vmem:[%s1 + $0x44] sm:$0xf]
        %v399 = vld [vmem:[%s1 + $0x48] sm:$0xf]
        %v400 = vld [vmem:[%s1 + $0x4c] sm:$0xf]
        %v401 = vld [vmem:[%s1 + $0x50] sm:$0xf]
        %v402 = vld [vmem:[%s1 + $0x54] sm:$0xf]
        %v403 = vld [vmem:[%s1 + $0x58] sm:$0xf]
        %v404 = vld [vmem:[%s1 + $0x5c] sm:$0xf]
        %v405 = vld [vmem:[%s1 + $0x60] sm:$0xf]
        %v406 = vld [vmem:[%s1 + $0x64] sm:$0xf]
        %v407 = vld [vmem:[%s1 + $0x68] sm:$0xf]
        %v408 = vld [vmem:[%s1 + $0x6c] sm:$0xf]
        %v409 = vld [vmem:[%s1 + $0x70] sm:$0xf]
        %v410 = vld [vmem:[%s1 + $0x74] sm:$0xf]
        %v411 = vld [vmem:[%s1 + $0x78] sm:$0xf]
        %v412 = vld [vmem:[%s1 + $0x7c] sm:$0xf]
        %v413 = vld [vmem:[%s4] sm:$0x1]
        %414 = vset.pattern.permute.xlu0 3
        %415 = vperm.xlu0 %414, %v330
        %v416 = vpop.permute.xlu0 %415
        %418 = vset.pattern.permute.xlu0 3
        %419 = vperm.xlu0 %418, %v331
        %v420 = vpop.permute.xlu0 %419
        %v423 = vperm.slane %v413, 0
        %v425 = vmul.f32 %v416, %v423
        %v426 = vmul.f32 %v420, %v423
        %v459 = vunpack.c.l.b16 %v381
        %v460 = vunpack.c.l.b16 %v382
        %v461 = vunpack.c.l.b16 %v383
        %v462 = vunpack.c.l.b16 %v384
        %v463 = vunpack.c.l.b16 %v385
        %v464 = vunpack.c.l.b16 %v386
        %v465 = vunpack.c.l.b16 %v387
        %v466 = vunpack.c.l.b16 %v388
        %v467 = vunpack.c.l.b16 %v389
        %v468 = vunpack.c.l.b16 %v390
        %v469 = vunpack.c.l.b16 %v391
        %v470 = vunpack.c.l.b16 %v392
        %v471 = vunpack.c.l.b16 %v393
        %v472 = vunpack.c.l.b16 %v394
        %v473 = vunpack.c.l.b16 %v395
        %v474 = vunpack.c.l.b16 %v396
        %v475 = vunpack.c.l.b16 %v397
        %v476 = vunpack.c.l.b16 %v398
        %v477 = vunpack.c.l.b16 %v399
        %v478 = vunpack.c.l.b16 %v400
        %v479 = vunpack.c.l.b16 %v401
        %v480 = vunpack.c.l.b16 %v402
        %v481 = vunpack.c.l.b16 %v403
        %v482 = vunpack.c.l.b16 %v404
        %v483 = vunpack.c.l.b16 %v405
        %v484 = vunpack.c.l.b16 %v406
        %v485 = vunpack.c.l.b16 %v407
        %v486 = vunpack.c.l.b16 %v408
        %v487 = vunpack.c.l.b16 %v409
        %v488 = vunpack.c.l.b16 %v410
        %v489 = vunpack.c.l.b16 %v411
        %v490 = vunpack.c.l.b16 %v412
        %v491 = vpack.c.b16 %v460, %v459
        %v492 = vpack.c.b16 %v462, %v461
        %v493 = vpack.c.b16 %v464, %v463
        %v494 = vpack.c.b16 %v466, %v465
        %v495 = vpack.c.b16 %v468, %v467
        %v496 = vpack.c.b16 %v470, %v469
        %v497 = vpack.c.b16 %v472, %v471
        %v498 = vpack.c.b16 %v474, %v473
        %v499 = vpack.c.b16 %v476, %v475
        %v500 = vpack.c.b16 %v478, %v477
        %v501 = vpack.c.b16 %v480, %v479
        %v502 = vpack.c.b16 %v482, %v481
        %v503 = vpack.c.b16 %v484, %v483
        %v504 = vpack.c.b16 %v486, %v485
        %v505 = vpack.c.b16 %v488, %v487
        %v506 = vpack.c.b16 %v490, %v489
        %523 = vmatpush.bf16.msra.mxu0 %v498
        %524 = vmatpush.bf16.msra.mxu0 %v497
        %525 = vmatpush.bf16.msra.mxu0 %v496
        %526 = vmatpush.bf16.msra.mxu0 %v495
        %527 = vmatpush.bf16.msra.mxu0 %v494
        %528 = vmatpush.bf16.msra.mxu0 %v493
        %529 = vmatpush.bf16.msra.mxu0 %v492
        %530 = vmatpush.bf16.msra.mxu0 %v491
        %531 = vmatmul.bf16.gmra.mxu0 %v373
        %v532 = vpop.f32.mrf.mxu0
        %v533 = vadd.f32 %v425, %v532
        %v534 = vpop.f32.mrf.mxu0
        %v535 = vadd.f32 %v426, %v534
        %536 = vdwg.mxu0
        %537 = vmatpush.bf16.msra.mxu0 %v506
        %538 = vmatpush.bf16.msra.mxu0 %v505
        %539 = vmatpush.bf16.msra.mxu0 %v504
        %540 = vmatpush.bf16.msra.mxu0 %v503
        %541 = vmatpush.bf16.msra.mxu0 %v502
        %542 = vmatpush.bf16.msra.mxu0 %v501
        %543 = vmatpush.bf16.msra.mxu0 %v500
        %544 = vmatpush.bf16.msra.mxu0 %v499
        %545 = vmatmul.bf16.gmra.mxu0 %v379
        %v546 = vpop.f32.mrf.mxu0
        %v547 = vadd.f32 %v533, %v546
        %v548 = vpop.f32.mrf.mxu0
        %v549 = vadd.f32 %v535, %v548
        %550 = vdwg.mxu0
        %v551 = vld [vmem:[%s5] sm:$0x1]
        %v553 = vperm.slane %v551, 0
        %v555 = vadd.f32 %v547, %v553
        %v556 = vadd.f32 %v549, %v553
        %v557 = vxor.u32 %v555, 2147483648
        %v558 = vxor.u32 %v556, 2147483648
        %v559 = vmul.f32 %v557, 1.442695
        %v560 = vpow.pop %v559
        %v561 = vmul.f32 %v558, 1.442695
        %v562 = vpow.pop %v561
        %v563 = vadd.f32 %v560, 1.0
        %v564 = vadd.f32 %v562, 1.0
        %v565 = vrcp.pop %v563
        %v566 = vmul.f32 %v563, %v565
        %v567 = vsub.f32 1.0, %v566
        %v568 = vmul.f32 %v565, %v567
        %v569 = vadd.f32 %v565, %v568
        %vm570 = vweird.f32 %v563
        %vm571 = vweird.f32 %v565
        %vm572 = vmor %vm570, %vm571
        %v573 = vsel %vm572, %v565, %v569
        %v574 = vand.u32 2147483647, %v563
        %vm575 = vcmp.eq.f32.partialorder %v574, 8.507059e+37
        %v576 = vand.u32 %v563, 2147483648
        %v577 = vor.u32 1.1754944e-38, %v576
        %v578 = vsel %vm575, %v577, %v573
        %v579 = vmul.f32 1.0, %v578
        %v580 = vrcp.pop %v564
        %v581 = vmul.f32 %v564, %v580
        %v582 = vsub.f32 1.0, %v581
        %v583 = vmul.f32 %v580, %v582
        %v584 = vadd.f32 %v580, %v583
        %vm585 = vweird.f32 %v564
        %vm586 = vweird.f32 %v580
        %vm587 = vmor %vm585, %vm586
        %v588 = vsel %vm587, %v580, %v584
        %v589 = vand.u32 2147483647, %v564
        %vm590 = vcmp.eq.f32.partialorder %v589, 8.507059e+37
        %v591 = vand.u32 %v564, 2147483648
        %v592 = vor.u32 1.1754944e-38, %v591
        %v593 = vsel %vm590, %v592, %v588
        %v594 = vmul.f32 1.0, %v593
        %v595 = vmul.f32 %v555, %v579
        %v596 = vmul.f32 %v556, %v594
        %v597 = vld [vmem:[%s6] sm:$0xff]
        %v598 = vld [vmem:[%s6 + $0x8] sm:$0xff]
        %v599 = vld [vmem:[%s6 + $0x10] sm:$0xff]
        %v600 = vld [vmem:[%s6 + $0x18] sm:$0xff]
        %v601 = vld [vmem:[%s7] sm:$0x1]
        %v603 = vperm.slane %v601, 0
        %vm605 = vcmask 261120
        %v607 = vsel %vm605, %v595, 0
        %v610 = vsel %vm605, %v596, 0
        %612 = vmatpush.msra.mxu0 0.0
        %613 = vmatpush.msra.mxu0 0.0
        %614 = vmatpush.msra.mxu0 0.0
        %615 = vmatpush.msra.mxu0 0.0
        %616 = vmatpush.msra.mxu0 0.0
        %617 = vmatpush.msra.mxu0 0.0
        %618 = vmatpush.msra.mxu0 0.0
        %619 = vmatpush.msra.mxu0 0.0
        %620 = vmatpush.msra.mxu0 0.0
        %621 = vmatpush.msra.mxu0 0.0
        %622 = vmatpush.msra.mxu0 0.0
        %623 = vmatpush.msra.mxu0 0.0
        %624 = vmatpush.msra.mxu0 %v600
        %625 = vmatpush.msra.mxu0 %v599
        %626 = vmatpush.msra.mxu0 %v598
        %627 = vmatpush.msra.mxu0 %v597
        %628 = vmatmul.f32.gmra.mxu0 %v607
        %v629 = vpop.f32.mrf.mxu0
        %v630 = vadd.f32 %v603, %v629
        %631 = vmatmul.f32.gmra.mxu0 %v610
        %v632 = vpop.f32.mrf.mxu0
        %v633 = vadd.f32 %v603, %v632
        %634 = vdwg.mxu0
        %v635 = vxor.u32 %v630, 2147483648
        %v636 = vxor.u32 %v633, 2147483648
        %v637 = vmul.f32 %v635, 1.442695
        %v638 = vpow.pop %v637
        %v639 = vmul.f32 %v636, 1.442695
        %v640 = vpow.pop %v639
        %v641 = vadd.f32 %v638, 1.0
        %v642 = vadd.f32 %v640, 1.0
        %v643 = vrcp.pop %v641
        %v644 = vmul.f32 %v641, %v643
        %v645 = vsub.f32 1.0, %v644
        %v646 = vmul.f32 %v643, %v645
        %v647 = vadd.f32 %v643, %v646
        %vm648 = vweird.f32 %v641
        %vm649 = vweird.f32 %v643
        %vm650 = vmor %vm648, %vm649
        %v651 = vsel %vm650, %v643, %v647
        %v652 = vand.u32 2147483647, %v641
        %vm653 = vcmp.eq.f32.partialorder %v652, 8.507059e+37
        %v654 = vand.u32 %v641, 2147483648
        %v655 = vor.u32 1.1754944e-38, %v654
        %v656 = vsel %vm653, %v655, %v651
        %v657 = vmul.f32 1.0, %v656
        %v658 = vrcp.pop %v642
        %v659 = vmul.f32 %v642, %v658
        %v660 = vsub.f32 1.0, %v659
        %v661 = vmul.f32 %v658, %v660
        %v662 = vadd.f32 %v658, %v661
        %vm663 = vweird.f32 %v642
        %vm664 = vweird.f32 %v658
        %vm665 = vmor %vm663, %vm664
        %v666 = vsel %vm665, %v658, %v662
        %v667 = vand.u32 2147483647, %v642
        %vm668 = vcmp.eq.f32.partialorder %v667, 8.507059e+37
        %v669 = vand.u32 %v642, 2147483648
        %v670 = vor.u32 1.1754944e-38, %v669
        %v671 = vsel %vm668, %v670, %v666
        %v672 = vmul.f32 1.0, %v671
        %v673 = vmul.f32 %v630, %v657
        %v674 = vmul.f32 %v633, %v672
        %v675 = vld [vmem:[%s8] sm:$0x1]
        %v677 = vperm.slane %v675, 0
        %v679 = vmul.f32 %v673, %v677
        %v680 = vmul.f32 %v674, %v677
        %v681 = vsel %vm605, %v679, 0.0
        %682 = vadd.xlane.f32.xlu0 %v681
        %v683 = vpop.xlane.xlu0 %682
        %v684 = vsel %vm605, %v680, 0.0
        %685 = vadd.xlane.f32.xlu0 %v684
        %v686 = vpop.xlane.xlu0 %685
        %v687 = vtanh.pop %v683
        %v688 = vtanh.pop %v686
        %v689 = vmul.f32 %v687, 10.0
        %v690 = vmul.f32 %v688, 10.0
        %v691 = vmul.f32 %v689, %v330
        %v692 = vmul.f32 %v690, %v331
        %694 = vset.pattern.permute.xlu0 4
        %695 = vperm.xlu0 %694, %v691
        %v696 = vpop.permute.xlu0 %695
        %699 = vset.pattern.permute.xlu0 4
        %700 = vperm.xlu0 %699, %v692
        %v701 = vpop.permute.xlu0 %700
        %v703 = vmul.f32 %v330, %v696
        %v704 = vmul.f32 %v331, %v701
        %vm705 = vcmask 23552
        %706 = vst.msk [vmem:[#allocation2] sm:$0xff] %vm705, %v703
        %707 = vst.msk [vmem:[#allocation2 + $0x8] sm:$0xff] %vm705, %v704
        %708 = vrot.lane.b32.xlu0 %v330, 126
        %v709 = vpop.permute.xlu0 %708
        %710 = vrot.lane.b32.xlu0 %v331, 126
        %v711 = vpop.permute.xlu0 %710
        %vm714 = vcmask 31768
        %715 = vst.msk [vmem:[#allocation2] sm:$0xff] %vm714, %v709
        %716 = vst.msk [vmem:[#allocation2 + $0x8] sm:$0xff] %vm714, %v711
        %v717 = vld [vmem:[#allocation3] sm:$0xff]
        %v718 = vld [vmem:[#allocation2] sm:$0xff]
        %v719 = vld [vmem:[#allocation2 + $0x8] sm:$0xff]
        %v720 = vpack.c.bf16 %v719, %v718
        %721 = vxpose.xlu0.c.b16.start [1/8] %v720, 128
        %722 = vxpose.xlu0.c.b16.cont [2/8] 0, 128
        %723 = vxpose.xlu0.c.b16.cont [3/8] 0, 128
        %724 = vxpose.xlu0.c.b16.cont [4/8] 0, 128
        %725 = vxpose.xlu0.c.b16.cont [5/8] 0, 128
        %726 = vxpose.xlu0.c.b16.cont [6/8] 0, 128
        %727 = vxpose.xlu0.c.b16.cont [7/8] 0, 128
        %728 = vxpose.xlu0.c.b16.end [8/8] 0, 128
        %v729 = vpop.trf.xlu0
        %v730 = vpop.trf.xlu0
        %v731 = vpop.trf.xlu0
        %v732 = vpop.trf.xlu0
        %v733 = vpop.trf.xlu0
        %v734 = vpop.trf.xlu0
        %v735 = vpop.trf.xlu0
        %v736 = vpop.trf.xlu0
        %vm737 = vcmask 130048
        %v739 = vsel %vm737, %v729, 0
        %741 = vmatpush.bf16.msra.mxu0 0
        %742 = vmatpush.bf16.msra.mxu0 0
        %743 = vmatpush.bf16.msra.mxu0 0
        %744 = vmatpush.bf16.msra.mxu0 0
        %745 = vmatpush.bf16.msra.mxu0 0
        %746 = vmatpush.bf16.msra.mxu0 0
        %747 = vmatpush.bf16.msra.mxu0 0
        %748 = vmatpush.bf16.msra.mxu0 %v373
        %749 = vmatmul.bf16.gmra.mxu0 %v739
        %v750 = vpop.f32.mrf.mxu0
        %v751 = vadd.f32 0.0, %v750
        %v752 = vpop.f32.mrf.mxu0
        %753 = vdwg.mxu0
        %v754 = vadd.f32 %v717, %v751
        %755 = vst [vmem:[#allocation3] sm:$0xff] %v754
        %p756 = scmp.eq.s32.totalorder %s21, 3
        // Predicated region
        $region61: #{tpu_custom_call.1} parent=55 // pred_check
          %p757 = pneg %p756
        $region62: #{tpu_custom_call.1} parent=55 // pred_check_branch
          %759 = sbr.rel (%p757) target = $region64
        $region63: #{tpu_custom_call.1} parent=55 // pred_region
          %v760 = vld [vmem:[#allocation3] sm:$0x7]
          %v761 = vrcp.pop 100.0
          %v762 = vmul.f32 100.0, %v761
          %v763 = vsub.f32 1.0, %v762
          %v764 = vmul.f32 %v761, %v763
          %v765 = vadd.f32 %v761, %v764
          %vm766 = vweird.f32 %v761
          %v767 = vsel %vm766, %v761, %v765
          %v768 = vmul.f32 %v760, %v767
          %v769 = vld [vmem:[%s2] sm:$0x7]
          %v770 = vadd.f32 %v769, %v768
          %v771 = vld [vmem:[%s3] sm:$0x1]
          %v773 = vperm.slane %v771, 0
          %v775 = vmul.f32 %v770, %v773
          %776 = vst [vmem:[#allocation4] sm:$0x7] %v775
        $region64: #{tpu_custom_call.1} parent=55 // pred_fallthru
          _
        // Predicated region
        $region65: #{tpu_custom_call.1} parent=55 // pred_check
          %p777 = pneg %p228
        $region66: #{tpu_custom_call.1} parent=55 // pred_check_branch
          %779 = sbr.rel (%p777) target = $region68
        $region67: #{tpu_custom_call.1} parent=55 // pred_region
          %781 = vsyncadd [#allocation5], 0
          %s783 = sshll.u32 [#allocation4], 4
          %s784 = int_to_ptr.vmem [resolvable:$true] %s783
          %s785 = sshll.u32 %s9, 4
          %s786 = int_to_ptr.hbm [resolvable:$true] %s785
          %788 = dma.vmem_to_hbm [thread:$0]  %s784, 64, %s786, [#allocation5]
        $region68: #{tpu_custom_call.1} parent=55 // pred_fallthru
          _
        // Predicated region
        $region69: #{tpu_custom_call.1} parent=55 // pred_check
          %p789 = pneg %p228
        $region70: #{tpu_custom_call.1} parent=55 // pred_check_branch
          %791 = sbr.rel (%p789) target = $region72
        $region71: #{tpu_custom_call.1} parent=55 // pred_region
          %793 = dma.done [#allocation5], 64
        $region72: #{tpu_custom_call.1} parent=55 // pred_fallthru
          _
      $region56: #{tpu_custom_call.1} parent=5 // pred_fallthru
        _
      %p794 = scmp.le.s32.totalorder 2, %s16
      // Predicated region
      $region73: #{tpu_custom_call.1} parent=5 // pred_check
        %p795 = pneg %p794
      $region74: #{tpu_custom_call.1} parent=5 // pred_check_branch
        %797 = sbr.rel (%p795) target = $region76
      $region75: #{tpu_custom_call.1} parent=5 // pred_region
        %s798 = ssub.s32 %s16, 2
      $region76: #{tpu_custom_call.1} parent=5 // pred_fallthru
        _
    $region6: #{tpu_custom_call.1} parent=1 // loop_footer
      %s20 = sadd.s32 1, %s16
    $region7: #{tpu_custom_call.1} parent=1 // loop_footer_branch
      %15 = sbr.rel target = $region3
    $region8: #{tpu_custom_call.1} parent=1 // loop_exit
      _
    %799 = vsyncpa [#allocation5], 1
    %s800 = scalar_lea.sflag [#allocation5], 1
    %801 = vsyncpa %s800, 1

</llo_original>
